<compile_context>
chip_gen: v7x
topology: tpu7x:2x2x1
jax: 0.10.0
libtpu: 0.0.40
codegen_flags: <defaults>
</compile_context>

<pallas_src>
import jax
import jax.numpy as jnp
from jax.experimental import pallas as pl
from jax.experimental.pallas import tpu as pltpu  # noqa: F401  (TPU backend)

N = 66       # matrix dimension from the reference module
K1 = 1.2     # value of the constant matrix k1
K2 = 0.8     # value of the constant matrix k2


def _model_kernel(x1_ref, x2_ref, inp_ref, out_ref):
    x1 = x1_ref[...]
    x2 = x2_ref[...]
    inp = inp_ref[...]

    # v1 = x1 @ (x2 + 1.2)  ==  x1 @ x2 + 1.2 * rowsum(x1)
    v1 = jnp.dot(x1, x2, preferred_element_type=jnp.float32)
    v1 = v1 + K1 * jnp.sum(x1, axis=1, keepdims=True)

    # v2 = inp @ (v1 + 0.8)  ==  inp @ v1 + 0.8 * rowsum(inp)
    v2 = jnp.dot(inp, v1, preferred_element_type=jnp.float32)
    v2 = v2 + K2 * jnp.sum(inp, axis=1, keepdims=True)

    out_ref[...] = v2.astype(out_ref.dtype)


def model_forward(x1, x2, inp):
    """Runs the fused Pallas kernel. All inputs are (66, 66) float32."""
    full_spec = pl.BlockSpec((N, N), lambda: (0, 0))
    return pl.pallas_call(
        _model_kernel,
        out_shape=jax.ShapeDtypeStruct((N, N), jnp.float32),
        grid=(),  # single program; whole 66x66 arrays live in VMEM
        in_specs=[full_spec, full_spec, full_spec],
        out_specs=full_spec,
    )(x1, x2, inp)


def _reference(x1, x2, inp):
    k1 = jnp.full((N, N), K1, dtype=jnp.float32)
    k2 = jnp.full((N, N), K2, dtype=jnp.float32)
    v1 = x1 @ (x2 + k1)
    v2 = inp @ (v1 + k2)
    return v2


if __name__ == "__main__":
    key = jax.random.PRNGKey(0)
    k_x1, k_x2, k_inp = jax.random.split(key, 3)
    x1 = jax.random.normal(k_x1, (N, N), dtype=jnp.float32)
    x2 = jax.random.normal(k_x2, (N, N), dtype=jnp.float32)
    inp = jax.random.normal(k_inp, (N, N), dtype=jnp.float32)

    out = jax.block_until_ready(model_forward(x1, x2, inp))
    ref = jax.block_until_ready(_reference(x1, x2, inp))

    assert out.shape == (N, N) and out.dtype == jnp.float32
    assert jnp.allclose(out, ref, rtol=1e-4, atol=1e-4), "mismatch vs reference"
    print("KERNEL_OK")
</pallas_src>

<mosaic_0001>
module attributes {stable_mosaic.version = 11 : i64} {
  func.func @_model_kernel(%arg0: memref<66x66xf32, #tpu.memory_space<vmem>>, %arg1: memref<66x66xf32, #tpu.memory_space<vmem>>, %arg2: memref<66x66xf32, #tpu.memory_space<vmem>>, %arg3: memref<66x66xf32, #tpu.memory_space<vmem>>) attributes {dimension_semantics = [], scalar_prefetch = 0 : i64, scratch_operands = 0 : i64, tpu.core_type = #tpu.core_type<tc>} {
    %c0 = arith.constant 0 : index
    %c0_0 = arith.constant 0 : index
    %0 = vector.load %arg0[%c0, %c0_0] : memref<66x66xf32, #tpu.memory_space<vmem>>, vector<66x66xf32>
    %c0_1 = arith.constant 0 : index
    %c0_2 = arith.constant 0 : index
    %1 = vector.load %arg1[%c0_1, %c0_2] : memref<66x66xf32, #tpu.memory_space<vmem>>, vector<66x66xf32>
    %c0_3 = arith.constant 0 : index
    %c0_4 = arith.constant 0 : index
    %2 = vector.load %arg2[%c0_3, %c0_4] : memref<66x66xf32, #tpu.memory_space<vmem>>, vector<66x66xf32>
    %cst = arith.constant dense<0.000000e+00> : vector<66x66xf32>
    %3 = tpu.matmul %0, %1, %cst {dimension_numbers = #tpu.dot_dimension_numbers<[1], [0], [0], [1], [0, 0, 1, 1], [], []>} : vector<66x66xf32>, vector<66x66xf32>, vector<66x66xf32> -> vector<66x66xf32>
    %cst_5 = arith.constant dense<0.000000e+00> : vector<66xf32>
    %4 = vector.multi_reduction <add>, %0, %cst_5 [1] : vector<66x66xf32> to vector<66xf32>
    %5 = vector.shape_cast %4 : vector<66xf32> to vector<66x1xf32>
    %cst_6 = arith.constant 1.200000e+00 : f32
    %6 = vector.broadcast %cst_6 : f32 to vector<66x1xf32>
    %7 = arith.mulf %6, %5 : vector<66x1xf32>
    %8 = vector.broadcast %7 : vector<66x1xf32> to vector<66x66xf32>
    %9 = arith.addf %3, %8 : vector<66x66xf32>
    %cst_7 = arith.constant dense<0.000000e+00> : vector<66x66xf32>
    %10 = tpu.matmul %2, %9, %cst_7 {dimension_numbers = #tpu.dot_dimension_numbers<[1], [0], [0], [1], [0, 0, 1, 1], [], []>} : vector<66x66xf32>, vector<66x66xf32>, vector<66x66xf32> -> vector<66x66xf32>
    %cst_8 = arith.constant dense<0.000000e+00> : vector<66xf32>
    %11 = vector.multi_reduction <add>, %2, %cst_8 [1] : vector<66x66xf32> to vector<66xf32>
    %12 = vector.shape_cast %11 : vector<66xf32> to vector<66x1xf32>
    %cst_9 = arith.constant 8.000000e-01 : f32
    %13 = vector.broadcast %cst_9 : f32 to vector<66x1xf32>
    %14 = arith.mulf %13, %12 : vector<66x1xf32>
    %15 = vector.broadcast %14 : vector<66x1xf32> to vector<66x66xf32>
    %16 = arith.addf %10, %15 : vector<66x66xf32>
    %c0_10 = arith.constant 0 : index
    %c0_11 = arith.constant 0 : index
    %17 = vector.load %arg3[%c0_10, %c0_11] : memref<66x66xf32, #tpu.memory_space<vmem>>, vector<66x66xf32>
    tpu.vector_store %arg3[%c0_10, %c0_11], %16 {strides = array<i32>} : memref<66x66xf32, #tpu.memory_space<vmem>>, vector<66x66xf32>,
    return
  }
}

</mosaic_0001>

<llo_original>
// kernel: tpu_custom_call.1
$region0: #{tpu_custom_call.1}
  #allocation0 [shape = 'u32[]', space=smem, size = 0x4, offset = 0x4, fixed_abs, tag = 'smem constant byte address 0x4 - core index']
  #allocation1 [shape = 'u32[144,128]{1,0:T(1,128)}', space=vmem, size = 0x12000, scoped, tag = 'internal scratch']
  %s0 = inlined_call_operand.hbm [shape: f32[66,66], index: 0, kind: input, shape index: {}]
  %s1 = inlined_call_operand.hbm [shape: f32[66,66], index: 1, kind: input, shape index: {}]
  %s2 = inlined_call_operand.hbm [shape: f32[66,66], index: 2, kind: input, shape index: {}]
  %s3 = inlined_call_operand.hbm [shape: f32[66,66], index: 3, kind: output, shape index: {}]
  %s4 = sld [smem:[#allocation0]]
  $region34: #{tpu_custom_call.1} parent=0
    _
  %s6 = ssub.s32 1, %s4
  %s7 = scalar_select 0, %s6, %s4
  $region1: #{tpu_custom_call.1} parent=0
    #allocation2 [shape = 'u8[36864]{0}', space=vmem, size = 0x9000, scoped, tag = 'input window, operand 0, single buffered']
    #allocation3 [shape = 's32[1]{0}', space=sflag, size = 0x4, scoped, tag = 'scoped memory for tpu_custom_call.1']
    #allocation4 [shape = 's32[1]{0}', space=sflag, size = 0x4, scoped, tag = 'scoped memory for tpu_custom_call.1']
    #allocation5 [shape = 'u8[36864]{0}', space=vmem, size = 0x9000, scoped, tag = 'input window, operand 1, single buffered']
    #allocation6 [shape = 's32[1]{0}', space=sflag, size = 0x4, scoped, tag = 'scoped memory for tpu_custom_call.1']
    #allocation7 [shape = 'u8[36864]{0}', space=vmem, size = 0x9000, scoped, tag = 'input window, operand 2, single buffered']
    #allocation8 [shape = 'u8[36864]{0}', space=vmem, size = 0x9000, scoped, tag = 'output window, operand 0, single buffered']
    %8 = vsyncpa [#allocation3], 0
    %9 = vsyncpa [#allocation6], 0
    %10 = vsyncpa [#allocation4], 0
    // Predicated region
    $region2: #{tpu_custom_call.1} parent=1 // pred_check
      _
    $region3: #{tpu_custom_call.1} parent=1 // pred_check_branch
      %12 = sbr.rel (0) target = $region5
    $region4: #{tpu_custom_call.1} parent=1 // pred_region
      %s14 = ssub.s32 1152, 1152
      %15 = vsyncadd [#allocation3], %s14
      %s16 = sshll.u32 [#allocation2], 4
      %s17 = int_to_ptr.vmem [resolvable:$true] %s16
      %22 = dma.hbm_to_vmem [thread:$0]  %s0, 1152, %s17, [#allocation3], 128, 128, 8
    $region5: #{tpu_custom_call.1} parent=1 // pred_fallthru
      _
    // Predicated region
    $region6: #{tpu_custom_call.1} parent=1 // pred_check
      _
    $region7: #{tpu_custom_call.1} parent=1 // pred_check_branch
      %24 = sbr.rel (0) target = $region9
    $region8: #{tpu_custom_call.1} parent=1 // pred_region
      %s26 = ssub.s32 1152, 1152
      %27 = vsyncadd [#allocation6], %s26
      %s28 = sshll.u32 [#allocation5], 4
      %s29 = int_to_ptr.vmem [resolvable:$true] %s28
      %34 = dma.hbm_to_vmem [thread:$0]  %s1, 1152, %s29, [#allocation6], 128, 128, 8
    $region9: #{tpu_custom_call.1} parent=1 // pred_fallthru
      _
    // Predicated region
    $region10: #{tpu_custom_call.1} parent=1 // pred_check
      _
    $region11: #{tpu_custom_call.1} parent=1 // pred_check_branch
      %36 = sbr.rel (0) target = $region13
    $region12: #{tpu_custom_call.1} parent=1 // pred_region
      %s38 = ssub.s32 1152, 1152
      %39 = vsyncadd [#allocation6], %s38
      %s40 = sshll.u32 [#allocation7], 4
      %s41 = int_to_ptr.vmem [resolvable:$true] %s40
      %46 = dma.hbm_to_vmem [thread:$0]  %s2, 1152, %s41, [#allocation6], 128, 128, 8
    $region13: #{tpu_custom_call.1} parent=1 // pred_fallthru
      _
    // Predicated region
    $region14: #{tpu_custom_call.1} parent=1 // pred_check
      _
    $region15: #{tpu_custom_call.1} parent=1 // pred_check_branch
      %48 = sbr.rel (0) target = $region17
    $region16: #{tpu_custom_call.1} parent=1 // pred_region
      %49 = dma.done [#allocation3], 1152
    $region17: #{tpu_custom_call.1} parent=1 // pred_fallthru
      _
    // Predicated region
    $region18: #{tpu_custom_call.1} parent=1 // pred_check
      _
    $region19: #{tpu_custom_call.1} parent=1 // pred_check_branch
      %51 = sbr.rel (0) target = $region21
    $region20: #{tpu_custom_call.1} parent=1 // pred_region
      %52 = dma.done [#allocation6], 1152
    $region21: #{tpu_custom_call.1} parent=1 // pred_fallthru
      _
    // Predicated region
    $region22: #{tpu_custom_call.1} parent=1 // pred_check
      _
    $region23: #{tpu_custom_call.1} parent=1 // pred_check_branch
      %54 = sbr.rel (0) target = $region25
    $region24: #{tpu_custom_call.1} parent=1 // pred_region
      %55 = dma.done [#allocation6], 1152
    $region25: #{tpu_custom_call.1} parent=1 // pred_fallthru
      _
    %v56 = vld [vmem:[#allocation2] sm:$0xff]
    %v57 = vld [vmem:[#allocation2 + $0x8] sm:$0xff]
    %v58 = vld [vmem:[#allocation2 + $0x10] sm:$0xff]
    %v59 = vld [vmem:[#allocation2 + $0x18] sm:$0xff]
    %v60 = vld [vmem:[#allocation2 + $0x20] sm:$0xff]
    %v61 = vld [vmem:[#allocation2 + $0x28] sm:$0xff]
    %v62 = vld [vmem:[#allocation2 + $0x30] sm:$0xff]
    %v63 = vld [vmem:[#allocation2 + $0x38] sm:$0xff]
    %v64 = vld [vmem:[#allocation2 + $0x40] sm:$0x3]
    %v65 = vld [vmem:[#allocation5] sm:$0xff]
    %v66 = vld [vmem:[#allocation5 + $0x8] sm:$0xff]
    %v67 = vld [vmem:[#allocation5 + $0x10] sm:$0xff]
    %v68 = vld [vmem:[#allocation5 + $0x18] sm:$0xff]
    %v69 = vld [vmem:[#allocation5 + $0x20] sm:$0xff]
    %v70 = vld [vmem:[#allocation5 + $0x28] sm:$0xff]
    %v71 = vld [vmem:[#allocation5 + $0x30] sm:$0xff]
    %v72 = vld [vmem:[#allocation5 + $0x38] sm:$0xff]
    %v73 = vld [vmem:[#allocation5 + $0x40] sm:$0x3]
    %v74 = vld [vmem:[#allocation7] sm:$0xff]
    %v75 = vld [vmem:[#allocation7 + $0x8] sm:$0xff]
    %v76 = vld [vmem:[#allocation7 + $0x10] sm:$0xff]
    %v77 = vld [vmem:[#allocation7 + $0x18] sm:$0xff]
    %v78 = vld [vmem:[#allocation7 + $0x20] sm:$0xff]
    %v79 = vld [vmem:[#allocation7 + $0x28] sm:$0xff]
    %v80 = vld [vmem:[#allocation7 + $0x30] sm:$0xff]
    %v81 = vld [vmem:[#allocation7 + $0x38] sm:$0xff]
    %v82 = vld [vmem:[#allocation7 + $0x40] sm:$0x3]
    %vm83 = vcmask 539648
    %v84 = vsel %vm83, %v56, 0.0
    %85 = vadd.xlane.f32.xlu0 %v84
    %v86 = vpop.xlane.xlu0 %85
    %v87 = vsel %vm83, %v57, 0.0
    %88 = vadd.xlane.f32.xlu0 %v87
    %v89 = vpop.xlane.xlu0 %88
    %v90 = vsel %vm83, %v58, 0.0
    %91 = vadd.xlane.f32.xlu0 %v90
    %v92 = vpop.xlane.xlu0 %91
    %v93 = vsel %vm83, %v59, 0.0
    %94 = vadd.xlane.f32.xlu0 %v93
    %v95 = vpop.xlane.xlu0 %94
    %v96 = vsel %vm83, %v60, 0.0
    %97 = vadd.xlane.f32.xlu0 %v96
    %v98 = vpop.xlane.xlu0 %97
    %v99 = vsel %vm83, %v61, 0.0
    %100 = vadd.xlane.f32.xlu0 %v99
    %v101 = vpop.xlane.xlu0 %100
    %v102 = vsel %vm83, %v62, 0.0
    %103 = vadd.xlane.f32.xlu0 %v102
    %v104 = vpop.xlane.xlu0 %103
    %v105 = vsel %vm83, %v63, 0.0
    %106 = vadd.xlane.f32.xlu0 %v105
    %v107 = vpop.xlane.xlu0 %106
    %vm108 = vcmask 533504
    %v109 = vsel %vm108, %v64, 0.0
    %110 = vadd.xlane.f32.xlu0 %v109
    %v111 = vpop.xlane.xlu0 %110
    %v112 = vmul.f32 %v86, 1.2
    %v113 = vmul.f32 %v89, 1.2
    %v114 = vmul.f32 %v92, 1.2
    %v115 = vmul.f32 %v95, 1.2
    %v116 = vmul.f32 %v98, 1.2
    %v117 = vmul.f32 %v101, 1.2
    %v118 = vmul.f32 %v104, 1.2
    %v119 = vmul.f32 %v107, 1.2
    %v120 = vmul.f32 %v111, 1.2
    %v122 = vsel %vm83, %v56, 0
    %v125 = vsel %vm83, %v57, 0
    %v128 = vsel %vm83, %v58, 0
    %v131 = vsel %vm83, %v59, 0
    %v134 = vsel %vm83, %v60, 0
    %v137 = vsel %vm83, %v61, 0
    %v140 = vsel %vm83, %v62, 0
    %v143 = vsel %vm83, %v63, 0
    %v146 = vsel %vm83, %v64, 0
    %vm148 = vcmask 1041408
    %v150 = vsel %vm148, %v73, 0
    %152 = vmatprep.subr.mxu0 0.0
    %153 = vmatpush1.msra.mxu0 %v65
    %154 = vmatprep.subr.mxu0 0.0
    %155 = vmatpush1.msra.mxu0 %v66
    %156 = vmatprep.subr.mxu0 0.0
    %157 = vmatpush1.msra.mxu0 %v67
    %158 = vmatprep.subr.mxu0 0.0
    %159 = vmatpush1.msra.mxu0 %v68
    %160 = vmatprep.subr.mxu0 0.0
    %161 = vmatpush1.msra.mxu0 %v69
    %162 = vmatprep.subr.mxu0 0.0
    %163 = vmatpush1.msra.mxu0 %v70
    %164 = vmatprep.subr.mxu0 0.0
    %165 = vmatpush1.msra.mxu0 %v71
    %166 = vmatprep.subr.mxu0 0.0
    %167 = vmatpush1.msra.mxu0 %v72
    %168 = vmatprep.subr.mxu0 0.0
    %169 = vmatpush1.msra.mxu0 %v150
    %170 = vmatprep.subr.mxu0 0.0
    %171 = vmatpush1.msra.mxu0 0.0
    %172 = vmatprep.subr.mxu0 0.0
    %173 = vmatpush1.msra.mxu0 0.0
    %174 = vmatprep.subr.mxu0 0.0
    %175 = vmatpush1.msra.mxu0 0.0
    %176 = vmatprep.subr.mxu0 0.0
    %177 = vmatpush1.msra.mxu0 0.0
    %178 = vmatprep.subr.mxu0 0.0
    %179 = vmatpush1.msra.mxu0 0.0
    %180 = vmatprep.subr.mxu0 0.0
    %181 = vmatpush1.msra.mxu0 0.0
    %182 = vmatprep.subr.mxu0 0.0
    %183 = vmatpush1.msra.mxu0 0.0
    %184 = vmatprep.subr.mxu0 0.0
    %185 = vmatpush1.msra.mxu0 0.0
    %186 = vmatprep.subr.mxu0 0.0
    %187 = vmatpush1.msra.mxu0 0.0
    %188 = vmatprep.subr.mxu0 0.0
    %189 = vmatpush1.msra.mxu0 0.0
    %190 = vmatprep.subr.mxu0 0.0
    %191 = vmatpush1.msra.mxu0 0.0
    %192 = vmatprep.subr.mxu0 0.0
    %193 = vmatpush1.msra.mxu0 0.0
    %194 = vmatprep.subr.mxu0 0.0
    %195 = vmatpush1.msra.mxu0 0.0
    %196 = vmatprep.subr.mxu0 0.0
    %197 = vmatpush1.msra.mxu0 0.0
    %198 = vmatprep.subr.mxu0 0.0
    %199 = vmatpush1.msra.mxu0 0.0
    %200 = vmatprep.subr.mxu0 0.0
    %201 = vmatpush1.msra.mxu0 0.0
    %202 = vmatprep.subr.mxu0 0.0
    %203 = vmatpush1.msra.mxu0 0.0
    %204 = vmatprep.subr.mxu0 0.0
    %205 = vmatpush1.msra.mxu0 0.0
    %206 = vmatprep.subr.mxu0 0.0
    %207 = vmatpush1.msra.mxu0 0.0
    %208 = vmatprep.subr.mxu0 0.0
    %209 = vmatpush1.msra.mxu0 0.0
    %210 = vmatprep.subr.mxu0 0.0
    %211 = vmatpush1.msra.mxu0 0.0
    %212 = vmatprep.subr.mxu0 0.0
    %213 = vmatpush1.msra.mxu0 0.0
    %214 = vmatprep.subr.mxu0 0.0
    %215 = vmatpush1.msra.mxu0 0.0
    %216 = vmatprep.mubr.f32.mxu0 0.0
    %217 = vmatmul.mubr.f32.gmra.mrb[0].mxu0 %v122
    %v218 = vpop.f32.mrb[0].mxu0
    %v219 = vadd.f32 %v112, %v218
    %v220 = vpop.f32.mrb[0].mxu0
    %221 = vmatprep.mubr.f32.mxu0 0.0
    %222 = vmatmul.mubr.f32.gmra.mrb[0].mxu0 %v125
    %v223 = vpop.f32.mrb[0].mxu0
    %v224 = vadd.f32 %v113, %v223
    %v225 = vpop.f32.mrb[0].mxu0
    %226 = vmatprep.mubr.f32.mxu0 0.0
    %227 = vmatmul.mubr.f32.gmra.mrb[0].mxu0 %v128
    %v228 = vpop.f32.mrb[0].mxu0
    %v229 = vadd.f32 %v114, %v228
    %v230 = vpop.f32.mrb[0].mxu0
    %231 = vmatprep.mubr.f32.mxu0 0.0
    %232 = vmatmul.mubr.f32.gmra.mrb[0].mxu0 %v131
    %v233 = vpop.f32.mrb[0].mxu0
    %v234 = vadd.f32 %v115, %v233
    %v235 = vpop.f32.mrb[0].mxu0
    %236 = vmatprep.mubr.f32.mxu0 0.0
    %237 = vmatmul.mubr.f32.gmra.mrb[0].mxu0 %v134
    %v238 = vpop.f32.mrb[0].mxu0
    %v239 = vadd.f32 %v116, %v238
    %v240 = vpop.f32.mrb[0].mxu0
    %241 = vmatprep.mubr.f32.mxu0 0.0
    %242 = vmatmul.mubr.f32.gmra.mrb[0].mxu0 %v137
    %v243 = vpop.f32.mrb[0].mxu0
    %v244 = vadd.f32 %v117, %v243
    %v245 = vpop.f32.mrb[0].mxu0
    %246 = vmatprep.mubr.f32.mxu0 0.0
    %247 = vmatmul.mubr.f32.gmra.mrb[0].mxu0 %v140
    %v248 = vpop.f32.mrb[0].mxu0
    %v249 = vadd.f32 %v118, %v248
    %v250 = vpop.f32.mrb[0].mxu0
    %251 = vmatprep.mubr.f32.mxu0 0.0
    %252 = vmatmul.mubr.f32.gmra.mrb[0].mxu0 %v143
    %v253 = vpop.f32.mrb[0].mxu0
    %v254 = vadd.f32 %v119, %v253
    %v255 = vpop.f32.mrb[0].mxu0
    %256 = vmatprep.mubr.f32.mxu0 0.0
    %257 = vmatmul.mubr.f32.gmra.mrb[0].mxu0 %v146
    %v258 = vpop.f32.mrb[0].mxu0
    %v259 = vadd.f32 %v120, %v258
    %v260 = vpop.f32.mrb[0].mxu0
    %261 = vdwg.mxu0
    %v262 = vsel %vm83, %v74, 0.0
    %263 = vadd.xlane.f32.xlu0 %v262
    %v264 = vpop.xlane.xlu0 %263
    %v265 = vsel %vm83, %v75, 0.0
    %266 = vadd.xlane.f32.xlu0 %v265
    %v267 = vpop.xlane.xlu0 %266
    %v268 = vsel %vm83, %v76, 0.0
    %269 = vadd.xlane.f32.xlu0 %v268
    %v270 = vpop.xlane.xlu0 %269
    %v271 = vsel %vm83, %v77, 0.0
    %272 = vadd.xlane.f32.xlu0 %v271
    %v273 = vpop.xlane.xlu0 %272
    %v274 = vsel %vm83, %v78, 0.0
    %275 = vadd.xlane.f32.xlu0 %v274
    %v276 = vpop.xlane.xlu0 %275
    %v277 = vsel %vm83, %v79, 0.0
    %278 = vadd.xlane.f32.xlu0 %v277
    %v279 = vpop.xlane.xlu0 %278
    %v280 = vsel %vm83, %v80, 0.0
    %281 = vadd.xlane.f32.xlu0 %v280
    %v282 = vpop.xlane.xlu0 %281
    %v283 = vsel %vm83, %v81, 0.0
    %284 = vadd.xlane.f32.xlu0 %v283
    %v285 = vpop.xlane.xlu0 %284
    %v286 = vsel %vm108, %v82, 0.0
    %287 = vadd.xlane.f32.xlu0 %v286
    %v288 = vpop.xlane.xlu0 %287
    %v289 = vmul.f32 %v264, 0.8
    %v290 = vmul.f32 %v267, 0.8
    %v291 = vmul.f32 %v270, 0.8
    %v292 = vmul.f32 %v273, 0.8
    %v293 = vmul.f32 %v276, 0.8
    %v294 = vmul.f32 %v279, 0.8
    %v295 = vmul.f32 %v282, 0.8
    %v296 = vmul.f32 %v285, 0.8
    %v297 = vmul.f32 %v288, 0.8
    %v299 = vsel %vm83, %v74, 0
    %v302 = vsel %vm83, %v75, 0
    %v305 = vsel %vm83, %v76, 0
    %v308 = vsel %vm83, %v77, 0
    %v311 = vsel %vm83, %v78, 0
    %v314 = vsel %vm83, %v79, 0
    %v317 = vsel %vm83, %v80, 0
    %v320 = vsel %vm83, %v81, 0
    %v323 = vsel %vm83, %v82, 0
    %v326 = vsel %vm148, %v259, 0
    %328 = vmatprep.subr.mxu0 0.0
    %329 = vmatpush1.msra.mxu0 %v219
    %330 = vmatprep.subr.mxu0 0.0
    %331 = vmatpush1.msra.mxu0 %v224
    %332 = vmatprep.subr.mxu0 0.0
    %333 = vmatpush1.msra.mxu0 %v229
    %334 = vmatprep.subr.mxu0 0.0
    %335 = vmatpush1.msra.mxu0 %v234
    %336 = vmatprep.subr.mxu0 0.0
    %337 = vmatpush1.msra.mxu0 %v239
    %338 = vmatprep.subr.mxu0 0.0
    %339 = vmatpush1.msra.mxu0 %v244
    %340 = vmatprep.subr.mxu0 0.0
    %341 = vmatpush1.msra.mxu0 %v249
    %342 = vmatprep.subr.mxu0 0.0
    %343 = vmatpush1.msra.mxu0 %v254
    %344 = vmatprep.subr.mxu0 0.0
    %345 = vmatpush1.msra.mxu0 %v326
    %346 = vmatprep.subr.mxu0 0.0
    %347 = vmatpush1.msra.mxu0 0.0
    %348 = vmatprep.subr.mxu0 0.0
    %349 = vmatpush1.msra.mxu0 0.0
    %350 = vmatprep.subr.mxu0 0.0
    %351 = vmatpush1.msra.mxu0 0.0
    %352 = vmatprep.subr.mxu0 0.0
    %353 = vmatpush1.msra.mxu0 0.0
    %354 = vmatprep.subr.mxu0 0.0
    %355 = vmatpush1.msra.mxu0 0.0
    %356 = vmatprep.subr.mxu0 0.0
    %357 = vmatpush1.msra.mxu0 0.0
    %358 = vmatprep.subr.mxu0 0.0
    %359 = vmatpush1.msra.mxu0 0.0
    %360 = vmatprep.subr.mxu0 0.0
    %361 = vmatpush1.msra.mxu0 0.0
    %362 = vmatprep.subr.mxu0 0.0
    %363 = vmatpush1.msra.mxu0 0.0
    %364 = vmatprep.subr.mxu0 0.0
    %365 = vmatpush1.msra.mxu0 0.0
    %366 = vmatprep.subr.mxu0 0.0
    %367 = vmatpush1.msra.mxu0 0.0
    %368 = vmatprep.subr.mxu0 0.0
    %369 = vmatpush1.msra.mxu0 0.0
    %370 = vmatprep.subr.mxu0 0.0
    %371 = vmatpush1.msra.mxu0 0.0
    %372 = vmatprep.subr.mxu0 0.0
    %373 = vmatpush1.msra.mxu0 0.0
    %374 = vmatprep.subr.mxu0 0.0
    %375 = vmatpush1.msra.mxu0 0.0
    %376 = vmatprep.subr.mxu0 0.0
    %377 = vmatpush1.msra.mxu0 0.0
    %378 = vmatprep.subr.mxu0 0.0
    %379 = vmatpush1.msra.mxu0 0.0
    %380 = vmatprep.subr.mxu0 0.0
    %381 = vmatpush1.msra.mxu0 0.0
    %382 = vmatprep.subr.mxu0 0.0
    %383 = vmatpush1.msra.mxu0 0.0
    %384 = vmatprep.subr.mxu0 0.0
    %385 = vmatpush1.msra.mxu0 0.0
    %386 = vmatprep.subr.mxu0 0.0
    %387 = vmatpush1.msra.mxu0 0.0
    %388 = vmatprep.subr.mxu0 0.0
    %389 = vmatpush1.msra.mxu0 0.0
    %390 = vmatprep.subr.mxu0 0.0
    %391 = vmatpush1.msra.mxu0 0.0
    %392 = vmatprep.mubr.f32.mxu0 0.0
    %393 = vmatmul.mubr.f32.gmra.mrb[0].mxu0 %v299
    %v394 = vpop.f32.mrb[0].mxu0
    %v395 = vadd.f32 %v289, %v394
    %v396 = vpop.f32.mrb[0].mxu0
    %397 = vmatprep.mubr.f32.mxu0 0.0
    %398 = vmatmul.mubr.f32.gmra.mrb[0].mxu0 %v302
    %v399 = vpop.f32.mrb[0].mxu0
    %v400 = vadd.f32 %v290, %v399
    %v401 = vpop.f32.mrb[0].mxu0
    %402 = vmatprep.mubr.f32.mxu0 0.0
    %403 = vmatmul.mubr.f32.gmra.mrb[0].mxu0 %v305
    %v404 = vpop.f32.mrb[0].mxu0
    %v405 = vadd.f32 %v291, %v404
    %v406 = vpop.f32.mrb[0].mxu0
    %407 = vmatprep.mubr.f32.mxu0 0.0
    %408 = vmatmul.mubr.f32.gmra.mrb[0].mxu0 %v308
    %v409 = vpop.f32.mrb[0].mxu0
    %v410 = vadd.f32 %v292, %v409
    %v411 = vpop.f32.mrb[0].mxu0
    %412 = vmatprep.mubr.f32.mxu0 0.0
    %413 = vmatmul.mubr.f32.gmra.mrb[0].mxu0 %v311
    %v414 = vpop.f32.mrb[0].mxu0
    %v415 = vadd.f32 %v293, %v414
    %v416 = vpop.f32.mrb[0].mxu0
    %417 = vmatprep.mubr.f32.mxu0 0.0
    %418 = vmatmul.mubr.f32.gmra.mrb[0].mxu0 %v314
    %v419 = vpop.f32.mrb[0].mxu0
    %v420 = vadd.f32 %v294, %v419
    %v421 = vpop.f32.mrb[0].mxu0
    %422 = vmatprep.mubr.f32.mxu0 0.0
    %423 = vmatmul.mubr.f32.gmra.mrb[0].mxu0 %v317
    %v424 = vpop.f32.mrb[0].mxu0
    %v425 = vadd.f32 %v295, %v424
    %v426 = vpop.f32.mrb[0].mxu0
    %427 = vmatprep.mubr.f32.mxu0 0.0
    %428 = vmatmul.mubr.f32.gmra.mrb[0].mxu0 %v320
    %v429 = vpop.f32.mrb[0].mxu0
    %v430 = vadd.f32 %v296, %v429
    %v431 = vpop.f32.mrb[0].mxu0
    %432 = vmatprep.mubr.f32.mxu0 0.0
    %433 = vmatmul.mubr.f32.gmra.mrb[0].mxu0 %v323
    %v434 = vpop.f32.mrb[0].mxu0
    %v435 = vadd.f32 %v297, %v434
    %v436 = vpop.f32.mrb[0].mxu0
    %437 = vdwg.mxu0
    %438 = vst.msk [vmem:[#allocation8] sm:$0xff] %vm83, %v395
    %439 = vst.msk [vmem:[#allocation8 + $0x8] sm:$0xff] %vm83, %v400
    %440 = vst.msk [vmem:[#allocation8 + $0x10] sm:$0xff] %vm83, %v405
    %441 = vst.msk [vmem:[#allocation8 + $0x18] sm:$0xff] %vm83, %v410
    %442 = vst.msk [vmem:[#allocation8 + $0x20] sm:$0xff] %vm83, %v415
    %443 = vst.msk [vmem:[#allocation8 + $0x28] sm:$0xff] %vm83, %v420
    %444 = vst.msk [vmem:[#allocation8 + $0x30] sm:$0xff] %vm83, %v425
    %445 = vst.msk [vmem:[#allocation8 + $0x38] sm:$0xff] %vm83, %v430
    %446 = vst.msk [vmem:[#allocation8 + $0x40] sm:$0x3] %vm108, %v435
    // Predicated region
    $region26: #{tpu_custom_call.1} parent=1 // pred_check
      _
    $region27: #{tpu_custom_call.1} parent=1 // pred_check_branch
      %448 = sbr.rel (0) target = $region29
    $region28: #{tpu_custom_call.1} parent=1 // pred_region
      %s450 = ssub.s32 1152, 1152
      %451 = vsyncadd [#allocation4], %s450
      %s452 = sshll.u32 [#allocation8], 4
      %s453 = int_to_ptr.vmem [resolvable:$true] %s452
      %458 = dma.vmem_to_hbm [thread:$0]  %s453, 1152, %s3, [#allocation4], 128, 128, 8
    $region29: #{tpu_custom_call.1} parent=1 // pred_fallthru
      _
    // Predicated region
    $region30: #{tpu_custom_call.1} parent=1 // pred_check
      _
    $region31: #{tpu_custom_call.1} parent=1 // pred_check_branch
      %460 = sbr.rel (0) target = $region33
    $region32: #{tpu_custom_call.1} parent=1 // pred_region
      %461 = dma.done [#allocation4], 1152
    $region33: #{tpu_custom_call.1} parent=1 // pred_fallthru
      _
    %462 = vsyncpa [#allocation3], 1
    %463 = vsyncpa [#allocation6], 1
    %464 = vsyncpa [#allocation4], 1

</llo_original>
